<compile_context>
chip_gen: v7x
topology: tpu7x:2x2x1
jax: 0.10.0
libtpu: 0.0.40
codegen_flags: <defaults>
</compile_context>

<pallas_src>
import functools

import jax
import jax.numpy as jnp
from jax.experimental import pallas as pl
from jax.experimental.pallas import tpu as pltpu


def support_encoder_kernel(x_ref, w1t_ref, b1_ref, w2t_ref, b2_ref,
                           gamma_ref, beta_ref, out_ref, *, eps, d_model,
                           compute_dtype):
    """out = LayerNorm(dropout(proj2(relu(proj1(x)))) + x); dropout = identity (eval)."""
    x = x_ref[...].astype(jnp.float32)                                   # (n, D)

    # proj1 + ReLU (weights pre-transposed wrapper-side -> plain row-major dot).
    h = jnp.dot(x.astype(compute_dtype), w1t_ref[...],
                preferred_element_type=jnp.float32) + b1_ref[...]
    h = jnp.maximum(h, 0.0)                                              # (n, d_inner)

    # proj2 + residual.
    # TODO(synk): nn.Dropout is identity in eval mode; training-mode dropout
    # would use pltpu.prng_seed / pltpu.stateful_bernoulli.
    z = jnp.dot(h.astype(compute_dtype), w2t_ref[...],
                preferred_element_type=jnp.float32) + b2_ref[...] + x

    if d_model == 1:
        # LayerNormalization short-circuits when z.size(1) == 1 (static branch).
        out_ref[...] = z.astype(out_ref.dtype)
        return

    # Custom LayerNormalization: torch.std is *unbiased* (divide by D-1) and
    # eps is added to sigma.  sum and sum-of-squares are issued independently
    # so the two XLU reductions can overlap the second matmul's result pop.
    # All vector math stays f32 (v5e has no bf16 VPU/EUP path).
    s1 = jnp.sum(z, axis=-1, keepdims=True)
    s2 = jnp.sum(z * z, axis=-1, keepdims=True)
    mu = s1 * (1.0 / d_model)
    var = jnp.maximum((s2 - d_model * mu * mu) * (1.0 / (d_model - 1)), 0.0)
    denom = jnp.sqrt(var) + eps
    inv = pl.reciprocal(denom, approx=True)      # EUP slot: nearly free
    inv = inv * (2.0 - denom * inv)              # one Newton step -> ~f32-exact
    out_ref[...] = ((z - mu) * inv * gamma_ref[...] + beta_ref[...]).astype(out_ref.dtype)


_VMEM_BUDGET_BYTES = 12 * 1024 * 1024   # stay inside v5e's 16 MiB default scoped VMEM


def _vmem_estimate(row_block, d_model, d_inner, io_itemsize):
    """Rough per-grid-step VMEM footprint: double-buffered x/out + f32 intermediates + params."""
    io = 2 * 2 * row_block * d_model * io_itemsize           # x + out, 2 buffers each
    interm = row_block * (d_inner + 2 * d_model) * 4         # h, z (+ headroom)
    params = (2 * d_model * d_inner + 2 * d_inner + 6 * d_model) * 4
    return io + interm + params


def support_encoder(x, w1, b1, w2, b2, gamma, beta, *, eps=0.001,
                    row_block=None, matmul_dtype=jnp.float32):
    """x: (N, d_model). w1: (d_inner, d_model), w2: (d_model, d_inner) (nn.Linear layout)."""
    N, D = x.shape
    d_inner, Dw = w1.shape
    assert Dw == D and w2.shape == (D, d_inner)

    # Wrapper-side layout plumbing (zero in-kernel relayout work).  Weights are
    # cast to matmul_dtype: bf16 gives ~3x MXU throughput on v5e/v6e; the f32
    # default keeps the 1e-4 check against the f32 reference tight.
    w1t = jnp.asarray(w1, jnp.float32).T.astype(matmul_dtype)    # (D, d_inner)
    w2t = jnp.asarray(w2, jnp.float32).T.astype(matmul_dtype)    # (d_inner, D)
    b1r = jnp.asarray(b1, jnp.float32).reshape(1, d_inner)
    b2r = jnp.asarray(b2, jnp.float32).reshape(1, D)
    g = jnp.asarray(gamma, jnp.float32).reshape(1, D)
    bb = jnp.asarray(beta, jnp.float32).reshape(1, D)

    kernel = functools.partial(support_encoder_kernel, eps=eps, d_model=D,
                               compute_dtype=matmul_dtype)

    if row_block is None:
        # Biggest block under the VMEM budget (measured: 512+ row tiles reach
        # ~85% of HBM roofline vs ~63% at 256), then shrink toward >= 4 grid
        # steps so each v7x TensorCore keeps DMA/compute overlap.
        row_block = 2048
        while row_block > 128 and _vmem_estimate(
                row_block, D, d_inner, x.dtype.itemsize) > _VMEM_BUDGET_BYTES:
            row_block //= 2
        while row_block > 128 and N < 4 * row_block:
            row_block //= 2

    if N < max(2 * row_block, 256):
        # Tiny-batch path: one gridless invocation, everything resident in VMEM,
        # no per-grid-step pipeline overhead (~0.35 us/step).  Never taken for
        # large N (the cdiv grid below handles any N, divisible or not).
        # TODO(synk): many tiny support sets should be stacked by the caller and
        # pushed through the grid path in ONE pallas_call -- at batch=8 wall
        # time is launch/DMA overhead, not compute.
        return pl.pallas_call(
            kernel,
            out_shape=jax.ShapeDtypeStruct((N, D), x.dtype),
            in_specs=[pl.BlockSpec(memory_space=pltpu.MemorySpace.VMEM)] * 7,
            out_specs=pl.BlockSpec(memory_space=pltpu.MemorySpace.VMEM),
        )(x, w1t, b1r, w2t, b2r, g, bb)

    # Large-batch path: row-tiled pl.cdiv grid (tail block masked by Pallas),
    # row axis marked "parallel" so v7x's two TensorCores split the batch;
    # weights / params use a constant index_map and stay resident.
    # (pipeline_mode=pl.Buffered(1) on the constant-index params would free a
    # little extra VMEM headroom; left at default double-buffering here.)
    itemsize = x.dtype.itemsize
    cost = pl.CostEstimate(
        flops=4 * N * D * d_inner + 12 * N * D,
        transcendentals=2 * N,
        bytes_accessed=2 * N * D * itemsize
        + (2 * D * d_inner + 2 * d_inner + 6 * D) * 4,
    )
    full = lambda shape: pl.BlockSpec(shape, lambda i: (0, 0))
    return pl.pallas_call(
        kernel,
        out_shape=jax.ShapeDtypeStruct((N, D), x.dtype),
        grid_spec=pltpu.PrefetchScalarGridSpec(
            num_scalar_prefetch=0,
            grid=(pl.cdiv(N, row_block),),
            in_specs=[pl.BlockSpec((row_block, D), lambda i: (i, 0)),
                      full((D, d_inner)), full((1, d_inner)),
                      full((d_inner, D)), full((1, D)),
                      full((1, D)), full((1, D))],
            out_specs=pl.BlockSpec((row_block, D), lambda i: (i, 0))),
        compiler_params=pltpu.CompilerParams(
            dimension_semantics=("parallel",)),
        cost_estimate=cost,
    )(x, w1t, b1r, w2t, b2r, g, bb)


def _reference(x, w1, b1, w2, b2, gamma, beta, eps):
    """Pure-JAX reference mirroring the PyTorch forward (eval mode)."""
    h = jax.nn.relu(jnp.dot(x, w1.T, precision=jax.lax.Precision.HIGHEST) + b1)
    z = jnp.dot(h, w2.T, precision=jax.lax.Precision.HIGHEST) + b2 + x
    if z.shape[1] == 1:
        return z
    mu = jnp.mean(z, axis=-1, keepdims=True)
    sigma = jnp.std(z, axis=-1, keepdims=True, ddof=1)   # torch.std: unbiased
    return (z - mu) / (sigma + eps) * gamma + beta


if __name__ == "__main__":
    d_model, d_inner, eps = 64, 128, 0.001

    key = jax.random.PRNGKey(0)
    k_x, k_w1, k_b1, k_w2, k_b2, k_x2 = jax.random.split(key, 6)

    # xavier_normal_ weights (as in the module's __init__), default Linear bias init.
    std1 = (2.0 / (d_model + d_inner)) ** 0.5
    w1 = std1 * jax.random.normal(k_w1, (d_inner, d_model), jnp.float32)
    std2 = (2.0 / (d_inner + d_model)) ** 0.5
    w2 = std2 * jax.random.normal(k_w2, (d_model, d_inner), jnp.float32)
    b1 = jax.random.uniform(k_b1, (d_inner,), jnp.float32,
                            -1.0 / d_model ** 0.5, 1.0 / d_model ** 0.5)
    b2 = jax.random.uniform(k_b2, (d_model,), jnp.float32,
                            -1.0 / d_inner ** 0.5, 1.0 / d_inner ** 0.5)
    gamma = jnp.ones((d_model,), jnp.float32)    # a_2
    beta = jnp.zeros((d_model,), jnp.float32)    # b_2

    # 1) Tiny support set (batch=8): gridless all-resident path.
    x_small = jax.random.normal(k_x, (8, d_model), jnp.float32)
    out_small = jax.block_until_ready(
        support_encoder(x_small, w1, b1, w2, b2, gamma, beta, eps=eps))
    ref_small = _reference(x_small, w1, b1, w2, b2, gamma, beta, eps)
    assert out_small.shape == x_small.shape
    assert jnp.allclose(out_small, ref_small, atol=1e-4, rtol=1e-4), \
        float(jnp.max(jnp.abs(out_small - ref_small)))

    # 2) Larger, non-divisible batch: row-tiled "parallel" grid path with a
    #    masked tail block (small row_block keeps the self-test cheap).
    x_big = jax.random.normal(k_x2, (500, d_model), jnp.float32)
    out_big = jax.block_until_ready(
        support_encoder(x_big, w1, b1, w2, b2, gamma, beta, eps=eps, row_block=128))
    ref_big = _reference(x_big, w1, b1, w2, b2, gamma, beta, eps)
    assert out_big.shape == x_big.shape
    assert jnp.allclose(out_big, ref_big, atol=1e-4, rtol=1e-4), \
        float(jnp.max(jnp.abs(out_big - ref_big)))

    print("KERNEL_OK")
</pallas_src>

<mosaic_0001>
module attributes {stable_mosaic.version = 11 : i64} {
  func.func @support_encoder_kernel(%arg0: memref<8x64xf32, #tpu.memory_space<vmem>>, %arg1: memref<64x128xf32, #tpu.memory_space<vmem>>, %arg2: memref<1x128xf32, #tpu.memory_space<vmem>>, %arg3: memref<128x64xf32, #tpu.memory_space<vmem>>, %arg4: memref<1x64xf32, #tpu.memory_space<vmem>>, %arg5: memref<1x64xf32, #tpu.memory_space<vmem>>, %arg6: memref<1x64xf32, #tpu.memory_space<vmem>>, %arg7: memref<8x64xf32, #tpu.memory_space<vmem>>) attributes {dimension_semantics = [], scalar_prefetch = 0 : i64, scratch_operands = 0 : i64, tpu.core_type = #tpu.core_type<tc>} {
    %c0 = arith.constant 0 : index
    %c0_0 = arith.constant 0 : index
    %0 = vector.load %arg0[%c0, %c0_0] : memref<8x64xf32, #tpu.memory_space<vmem>>, vector<8x64xf32>
    %c0_1 = arith.constant 0 : index
    %c0_2 = arith.constant 0 : index
    %1 = vector.load %arg1[%c0_1, %c0_2] : memref<64x128xf32, #tpu.memory_space<vmem>>, vector<64x128xf32>
    %cst = arith.constant dense<0.000000e+00> : vector<8x128xf32>
    %2 = tpu.matmul %0, %1, %cst {dimension_numbers = #tpu.dot_dimension_numbers<[1], [0], [0], [1], [0, 0, 1, 1], [], []>} : vector<8x64xf32>, vector<64x128xf32>, vector<8x128xf32> -> vector<8x128xf32>
    %c0_3 = arith.constant 0 : index
    %c0_4 = arith.constant 0 : index
    %3 = vector.load %arg2[%c0_3, %c0_4] : memref<1x128xf32, #tpu.memory_space<vmem>>, vector<1x128xf32>
    %4 = vector.broadcast %3 : vector<1x128xf32> to vector<8x128xf32>
    %5 = arith.addf %2, %4 : vector<8x128xf32>
    %cst_5 = arith.constant 0.000000e+00 : f32
    %6 = vector.broadcast %cst_5 : f32 to vector<8x128xf32>
    %7 = arith.maximumf %5, %6 : vector<8x128xf32>
    %c0_6 = arith.constant 0 : index
    %c0_7 = arith.constant 0 : index
    %8 = vector.load %arg3[%c0_6, %c0_7] : memref<128x64xf32, #tpu.memory_space<vmem>>, vector<128x64xf32>
    %cst_8 = arith.constant dense<0.000000e+00> : vector<8x64xf32>
    %9 = tpu.matmul %7, %8, %cst_8 {dimension_numbers = #tpu.dot_dimension_numbers<[1], [0], [0], [1], [0, 0, 1, 1], [], []>} : vector<8x128xf32>, vector<128x64xf32>, vector<8x64xf32> -> vector<8x64xf32>
    %c0_9 = arith.constant 0 : index
    %c0_10 = arith.constant 0 : index
    %10 = vector.load %arg4[%c0_9, %c0_10] : memref<1x64xf32, #tpu.memory_space<vmem>>, vector<1x64xf32>
    %11 = vector.broadcast %10 : vector<1x64xf32> to vector<8x64xf32>
    %12 = arith.addf %9, %11 : vector<8x64xf32>
    %13 = arith.addf %12, %0 : vector<8x64xf32>
    %cst_11 = arith.constant dense<0.000000e+00> : vector<8xf32>
    %14 = vector.multi_reduction <add>, %13, %cst_11 [1] : vector<8x64xf32> to vector<8xf32>
    %15 = vector.shape_cast %14 : vector<8xf32> to vector<8x1xf32>
    %16 = arith.mulf %13, %13 : vector<8x64xf32>
    %cst_12 = arith.constant dense<0.000000e+00> : vector<8xf32>
    %17 = vector.multi_reduction <add>, %16, %cst_12 [1] : vector<8x64xf32> to vector<8xf32>
    %18 = vector.shape_cast %17 : vector<8xf32> to vector<8x1xf32>
    %cst_13 = arith.constant 1.562500e-02 : f32
    %19 = vector.broadcast %cst_13 : f32 to vector<8x1xf32>
    %20 = arith.mulf %15, %19 : vector<8x1xf32>
    %cst_14 = arith.constant 6.400000e+01 : f32
    %21 = vector.broadcast %cst_14 : f32 to vector<8x1xf32>
    %22 = arith.mulf %21, %20 : vector<8x1xf32>
    %23 = arith.mulf %22, %20 : vector<8x1xf32>
    %24 = arith.subf %18, %23 : vector<8x1xf32>
    %cst_15 = arith.constant 0.0158730168 : f32
    %25 = vector.broadcast %cst_15 : f32 to vector<8x1xf32>
    %26 = arith.mulf %24, %25 : vector<8x1xf32>
    %cst_16 = arith.constant 0.000000e+00 : f32
    %27 = vector.broadcast %cst_16 : f32 to vector<8x1xf32>
    %28 = arith.maximumf %26, %27 : vector<8x1xf32>
    %29 = math.sqrt %28 : vector<8x1xf32>
    %cst_17 = arith.constant 1.000000e-03 : f32
    %30 = vector.broadcast %cst_17 : f32 to vector<8x1xf32>
    %31 = arith.addf %29, %30 : vector<8x1xf32>
    %32 = tpu.reciprocal %31 {approx = true} : vector<8x1xf32> -> vector<8x1xf32>
    %33 = arith.mulf %31, %32 : vector<8x1xf32>
    %cst_18 = arith.constant 2.000000e+00 : f32
    %34 = vector.broadcast %cst_18 : f32 to vector<8x1xf32>
    %35 = arith.subf %34, %33 : vector<8x1xf32>
    %36 = arith.mulf %32, %35 : vector<8x1xf32>
    %37 = vector.broadcast %20 : vector<8x1xf32> to vector<8x64xf32>
    %38 = arith.subf %13, %37 : vector<8x64xf32>
    %39 = vector.broadcast %36 : vector<8x1xf32> to vector<8x64xf32>
    %40 = arith.mulf %38, %39 : vector<8x64xf32>
    %c0_19 = arith.constant 0 : index
    %c0_20 = arith.constant 0 : index
    %41 = vector.load %arg5[%c0_19, %c0_20] : memref<1x64xf32, #tpu.memory_space<vmem>>, vector<1x64xf32>
    %42 = vector.broadcast %41 : vector<1x64xf32> to vector<8x64xf32>
    %43 = arith.mulf %40, %42 : vector<8x64xf32>
    %c0_21 = arith.constant 0 : index
    %c0_22 = arith.constant 0 : index
    %44 = vector.load %arg6[%c0_21, %c0_22] : memref<1x64xf32, #tpu.memory_space<vmem>>, vector<1x64xf32>
    %45 = vector.broadcast %44 : vector<1x64xf32> to vector<8x64xf32>
    %46 = arith.addf %43, %45 : vector<8x64xf32>
    %c0_23 = arith.constant 0 : index
    %c0_24 = arith.constant 0 : index
    %47 = vector.load %arg7[%c0_23, %c0_24] : memref<8x64xf32, #tpu.memory_space<vmem>>, vector<8x64xf32>
    tpu.vector_store %arg7[%c0_23, %c0_24], %46 {strides = array<i32>} : memref<8x64xf32, #tpu.memory_space<vmem>>, vector<8x64xf32>,
    return
  }
}

</mosaic_0001>

<llo_original>
// kernel: tpu_custom_call.1
$region0: #{tpu_custom_call.1}
  #allocation0 [shape = 'u32[]', space=smem, size = 0x4, offset = 0x4, fixed_abs, tag = 'smem constant byte address 0x4 - core index']
  #allocation1 [shape = 'u32[144,128]{1,0:T(1,128)}', space=vmem, size = 0x12000, scoped, tag = 'internal scratch']
  %s0 = inlined_call_operand.vmem [shape: f32[8,64], index: 0, kind: input, shape index: {}]
  %s1 = inlined_call_operand.vmem [shape: f32[64,128], index: 1, kind: input, shape index: {}]
  %s2 = inlined_call_operand.vmem [shape: f32[1,128], index: 2, kind: input, shape index: {}]
  %s3 = inlined_call_operand.vmem [shape: f32[128,64], index: 3, kind: input, shape index: {}]
  %s4 = inlined_call_operand.vmem [shape: f32[1,64], index: 4, kind: input, shape index: {}]
  %s5 = inlined_call_operand.vmem [shape: f32[1,64], index: 5, kind: input, shape index: {}]
  %s6 = inlined_call_operand.vmem [shape: f32[1,64], index: 6, kind: input, shape index: {}]
  %s7 = inlined_call_operand.hbm [shape: f32[8,64], index: 7, kind: output, shape index: {}]
  %s8 = sld [smem:[#allocation0]]
  $region38: #{tpu_custom_call.1} parent=0
    _
  %s10 = ssub.s32 1, %s8
  %s11 = scalar_select 0, %s10, %s8
  $region1: #{tpu_custom_call.1} parent=0
    #allocation2 [shape = 'u8[4096]{0}', space=vmem, size = 0x1000, scoped, tag = 'output window, operand 0, single buffered']
    #allocation3 [shape = 's32[1]{0}', space=sflag, size = 0x4, scoped, tag = 'scoped memory for tpu_custom_call.1']
    %12 = vsyncpa [#allocation3], 0
    // Predicated region
    $region2: #{tpu_custom_call.1} parent=1 // pred_check
      _
    $region3: #{tpu_custom_call.1} parent=1 // pred_check_branch
      %14 = sbr.rel (0) target = $region5
    $region4: #{tpu_custom_call.1} parent=1 // pred_region
      _
    $region5: #{tpu_custom_call.1} parent=1 // pred_fallthru
      _
    // Predicated region
    $region6: #{tpu_custom_call.1} parent=1 // pred_check
      _
    $region7: #{tpu_custom_call.1} parent=1 // pred_check_branch
      %16 = sbr.rel (0) target = $region9
    $region8: #{tpu_custom_call.1} parent=1 // pred_region
      _
    $region9: #{tpu_custom_call.1} parent=1 // pred_fallthru
      _
    // Predicated region
    $region10: #{tpu_custom_call.1} parent=1 // pred_check
      _
    $region11: #{tpu_custom_call.1} parent=1 // pred_check_branch
      %18 = sbr.rel (0) target = $region13
    $region12: #{tpu_custom_call.1} parent=1 // pred_region
      _
    $region13: #{tpu_custom_call.1} parent=1 // pred_fallthru
      _
    // Predicated region
    $region14: #{tpu_custom_call.1} parent=1 // pred_check
      _
    $region15: #{tpu_custom_call.1} parent=1 // pred_check_branch
      %20 = sbr.rel (0) target = $region17
    $region16: #{tpu_custom_call.1} parent=1 // pred_region
      _
    $region17: #{tpu_custom_call.1} parent=1 // pred_fallthru
      _
    // Predicated region
    $region18: #{tpu_custom_call.1} parent=1 // pred_check
      _
    $region19: #{tpu_custom_call.1} parent=1 // pred_check_branch
      %22 = sbr.rel (0) target = $region21
    $region20: #{tpu_custom_call.1} parent=1 // pred_region
      _
    $region21: #{tpu_custom_call.1} parent=1 // pred_fallthru
      _
    // Predicated region
    $region22: #{tpu_custom_call.1} parent=1 // pred_check
      _
    $region23: #{tpu_custom_call.1} parent=1 // pred_check_branch
      %24 = sbr.rel (0) target = $region25
    $region24: #{tpu_custom_call.1} parent=1 // pred_region
      _
    $region25: #{tpu_custom_call.1} parent=1 // pred_fallthru
      _
    // Predicated region
    $region26: #{tpu_custom_call.1} parent=1 // pred_check
      _
    $region27: #{tpu_custom_call.1} parent=1 // pred_check_branch
      %26 = sbr.rel (0) target = $region29
    $region28: #{tpu_custom_call.1} parent=1 // pred_region
      _
    $region29: #{tpu_custom_call.1} parent=1 // pred_fallthru
      _
    %v27 = vld [vmem:[%s0] sm:$0xff]
    %v28 = vld [vmem:[%s1] sm:$0xff]
    %v29 = vld [vmem:[%s1 + $0x8] sm:$0xff]
    %v30 = vld [vmem:[%s1 + $0x10] sm:$0xff]
    %v31 = vld [vmem:[%s1 + $0x18] sm:$0xff]
    %v32 = vld [vmem:[%s1 + $0x20] sm:$0xff]
    %v33 = vld [vmem:[%s1 + $0x28] sm:$0xff]
    %v34 = vld [vmem:[%s1 + $0x30] sm:$0xff]
    %v35 = vld [vmem:[%s1 + $0x38] sm:$0xff]
    %v36 = vld [vmem:[%s2] sm:$0x1]
    %v38 = vlaneseq
    %v39 = vshrl.u32 %v38, 7
    %v40 = vsub.s32 0, %v39
    %v41 = vrot.slane %v36, %v40
    %vm43 = vcmask 523264
    %v45 = vsel %vm43, %v27, 0
    %47 = vmatprep.subr.mxu0 0.0
    %48 = vmatpush1.msra.mxu0 %v28
    %49 = vmatprep.subr.mxu0 0.0
    %50 = vmatpush1.msra.mxu0 %v29
    %51 = vmatprep.subr.mxu0 0.0
    %52 = vmatpush1.msra.mxu0 %v30
    %53 = vmatprep.subr.mxu0 0.0
    %54 = vmatpush1.msra.mxu0 %v31
    %55 = vmatprep.subr.mxu0 0.0
    %56 = vmatpush1.msra.mxu0 %v32
    %57 = vmatprep.subr.mxu0 0.0
    %58 = vmatpush1.msra.mxu0 %v33
    %59 = vmatprep.subr.mxu0 0.0
    %60 = vmatpush1.msra.mxu0 %v34
    %61 = vmatprep.subr.mxu0 0.0
    %62 = vmatpush1.msra.mxu0 %v35
    %63 = vmatprep.subr.mxu0 0.0
    %64 = vmatpush1.msra.mxu0 0.0
    %65 = vmatprep.subr.mxu0 0.0
    %66 = vmatpush1.msra.mxu0 0.0
    %67 = vmatprep.subr.mxu0 0.0
    %68 = vmatpush1.msra.mxu0 0.0
    %69 = vmatprep.subr.mxu0 0.0
    %70 = vmatpush1.msra.mxu0 0.0
    %71 = vmatprep.subr.mxu0 0.0
    %72 = vmatpush1.msra.mxu0 0.0
    %73 = vmatprep.subr.mxu0 0.0
    %74 = vmatpush1.msra.mxu0 0.0
    %75 = vmatprep.subr.mxu0 0.0
    %76 = vmatpush1.msra.mxu0 0.0
    %77 = vmatprep.subr.mxu0 0.0
    %78 = vmatpush1.msra.mxu0 0.0
    %79 = vmatprep.subr.mxu0 0.0
    %80 = vmatpush1.msra.mxu0 0.0
    %81 = vmatprep.subr.mxu0 0.0
    %82 = vmatpush1.msra.mxu0 0.0
    %83 = vmatprep.subr.mxu0 0.0
    %84 = vmatpush1.msra.mxu0 0.0
    %85 = vmatprep.subr.mxu0 0.0
    %86 = vmatpush1.msra.mxu0 0.0
    %87 = vmatprep.subr.mxu0 0.0
    %88 = vmatpush1.msra.mxu0 0.0
    %89 = vmatprep.subr.mxu0 0.0
    %90 = vmatpush1.msra.mxu0 0.0
    %91 = vmatprep.subr.mxu0 0.0
    %92 = vmatpush1.msra.mxu0 0.0
    %93 = vmatprep.subr.mxu0 0.0
    %94 = vmatpush1.msra.mxu0 0.0
    %95 = vmatprep.subr.mxu0 0.0
    %96 = vmatpush1.msra.mxu0 0.0
    %97 = vmatprep.subr.mxu0 0.0
    %98 = vmatpush1.msra.mxu0 0.0
    %99 = vmatprep.subr.mxu0 0.0
    %100 = vmatpush1.msra.mxu0 0.0
    %101 = vmatprep.subr.mxu0 0.0
    %102 = vmatpush1.msra.mxu0 0.0
    %103 = vmatprep.subr.mxu0 0.0
    %104 = vmatpush1.msra.mxu0 0.0
    %105 = vmatprep.subr.mxu0 0.0
    %106 = vmatpush1.msra.mxu0 0.0
    %107 = vmatprep.subr.mxu0 0.0
    %108 = vmatpush1.msra.mxu0 0.0
    %109 = vmatprep.subr.mxu0 0.0
    %110 = vmatpush1.msra.mxu0 0.0
    %111 = vmatprep.mubr.f32.mxu0 0.0
    %112 = vmatmul.mubr.f32.gmra.mrb[0].mxu0 %v45
    %v113 = vpop.f32.mrb[0].mxu0
    %v114 = vadd.f32 %v41, %v113
    %v115 = vpop.f32.mrb[0].mxu0
    %116 = vdwg.mxu0
    %v117 = vmax.f32 %v114, 0.0
    %v118 = vld [vmem:[%s3] sm:$0xff]
    %v119 = vld [vmem:[%s3 + $0x8] sm:$0xff]
    %v120 = vld [vmem:[%s3 + $0x10] sm:$0xff]
    %v121 = vld [vmem:[%s3 + $0x18] sm:$0xff]
    %v122 = vld [vmem:[%s3 + $0x20] sm:$0xff]
    %v123 = vld [vmem:[%s3 + $0x28] sm:$0xff]
    %v124 = vld [vmem:[%s3 + $0x30] sm:$0xff]
    %v125 = vld [vmem:[%s3 + $0x38] sm:$0xff]
    %v126 = vld [vmem:[%s3 + $0x40] sm:$0xff]
    %v127 = vld [vmem:[%s3 + $0x48] sm:$0xff]
    %v128 = vld [vmem:[%s3 + $0x50] sm:$0xff]
    %v129 = vld [vmem:[%s3 + $0x58] sm:$0xff]
    %v130 = vld [vmem:[%s3 + $0x60] sm:$0xff]
    %v131 = vld [vmem:[%s3 + $0x68] sm:$0xff]
    %v132 = vld [vmem:[%s3 + $0x70] sm:$0xff]
    %v133 = vld [vmem:[%s3 + $0x78] sm:$0xff]
    %v134 = vld [vmem:[%s4] sm:$0x1]
    %v136 = vlaneseq
    %v137 = vshrl.u32 %v136, 7
    %v138 = vsub.s32 0, %v137
    %v139 = vrot.slane %v134, %v138
    %141 = vmatprep.subr.mxu0 0.0
    %142 = vmatpush1.msra.mxu0 %v118
    %143 = vmatprep.subr.mxu0 0.0
    %144 = vmatpush1.msra.mxu0 %v119
    %145 = vmatprep.subr.mxu0 0.0
    %146 = vmatpush1.msra.mxu0 %v120
    %147 = vmatprep.subr.mxu0 0.0
    %148 = vmatpush1.msra.mxu0 %v121
    %149 = vmatprep.subr.mxu0 0.0
    %150 = vmatpush1.msra.mxu0 %v122
    %151 = vmatprep.subr.mxu0 0.0
    %152 = vmatpush1.msra.mxu0 %v123
    %153 = vmatprep.subr.mxu0 0.0
    %154 = vmatpush1.msra.mxu0 %v124
    %155 = vmatprep.subr.mxu0 0.0
    %156 = vmatpush1.msra.mxu0 %v125
    %157 = vmatprep.subr.mxu0 0.0
    %158 = vmatpush1.msra.mxu0 %v126
    %159 = vmatprep.subr.mxu0 0.0
    %160 = vmatpush1.msra.mxu0 %v127
    %161 = vmatprep.subr.mxu0 0.0
    %162 = vmatpush1.msra.mxu0 %v128
    %163 = vmatprep.subr.mxu0 0.0
    %164 = vmatpush1.msra.mxu0 %v129
    %165 = vmatprep.subr.mxu0 0.0
    %166 = vmatpush1.msra.mxu0 %v130
    %167 = vmatprep.subr.mxu0 0.0
    %168 = vmatpush1.msra.mxu0 %v131
    %169 = vmatprep.subr.mxu0 0.0
    %170 = vmatpush1.msra.mxu0 %v132
    %171 = vmatprep.subr.mxu0 0.0
    %172 = vmatpush1.msra.mxu0 %v133
    %173 = vmatprep.subr.mxu0 0.0
    %174 = vmatpush1.msra.mxu0 0.0
    %175 = vmatprep.subr.mxu0 0.0
    %176 = vmatpush1.msra.mxu0 0.0
    %177 = vmatprep.subr.mxu0 0.0
    %178 = vmatpush1.msra.mxu0 0.0
    %179 = vmatprep.subr.mxu0 0.0
    %180 = vmatpush1.msra.mxu0 0.0
    %181 = vmatprep.subr.mxu0 0.0
    %182 = vmatpush1.msra.mxu0 0.0
    %183 = vmatprep.subr.mxu0 0.0
    %184 = vmatpush1.msra.mxu0 0.0
    %185 = vmatprep.subr.mxu0 0.0
    %186 = vmatpush1.msra.mxu0 0.0
    %187 = vmatprep.subr.mxu0 0.0
    %188 = vmatpush1.msra.mxu0 0.0
    %189 = vmatprep.subr.mxu0 0.0
    %190 = vmatpush1.msra.mxu0 0.0
    %191 = vmatprep.subr.mxu0 0.0
    %192 = vmatpush1.msra.mxu0 0.0
    %193 = vmatprep.subr.mxu0 0.0
    %194 = vmatpush1.msra.mxu0 0.0
    %195 = vmatprep.subr.mxu0 0.0
    %196 = vmatpush1.msra.mxu0 0.0
    %197 = vmatprep.subr.mxu0 0.0
    %198 = vmatpush1.msra.mxu0 0.0
    %199 = vmatprep.subr.mxu0 0.0
    %200 = vmatpush1.msra.mxu0 0.0
    %201 = vmatprep.subr.mxu0 0.0
    %202 = vmatpush1.msra.mxu0 0.0
    %203 = vmatprep.subr.mxu0 0.0
    %204 = vmatpush1.msra.mxu0 0.0
    %205 = vmatprep.mubr.f32.mxu0 0.0
    %206 = vmatmul.mubr.f32.gmra.mrb[0].mxu0 %v117
    %v207 = vpop.f32.mrb[0].mxu0
    %v208 = vadd.f32 %v139, %v207
    %v209 = vpop.f32.mrb[0].mxu0
    %210 = vdwg.mxu0
    %v211 = vadd.f32 %v208, %v27
    %v212 = vsel %vm43, %v211, 0.0
    %213 = vadd.xlane.f32.xlu0 %v212
    %v214 = vpop.xlane.xlu0 %213
    %v215 = vmul.f32 %v211, %v211
    %v216 = vsel %vm43, %v215, 0.0
    %217 = vadd.xlane.f32.xlu0 %v216
    %v218 = vpop.xlane.xlu0 %217
    %v219 = vmul.f32 %v214, 0.015625
    %v220 = vmul.f32 %v219, 64.0
    %v221 = vmul.f32 %v220, %v219
    %v222 = vsub.f32 %v218, %v221
    %v223 = vmul.f32 %v222, 0.015873017
    %v224 = vmax.f32 %v223, 0.0
    %v225 = vrsqrt.pop %v224
    %v226 = vmul.f32 %v224, %v225
    %vm227 = vcmp.eq.f32.partialorder %v224, inf
    %v228 = vsel %vm227, %v224, %v226
    %vm229 = vcmp.eq.f32.partialorder %v224, 0.0
    %v230 = vand.u32 %v224, 2147483648
    %v231 = vsel %vm229, %v230, %v228
    %v232 = vadd.f32 %v231, 0.001
    %v233 = vrcp.pop %v232
    %v234 = vmul.f32 %v232, %v233
    %v235 = vsub.f32 2.0, %v234
    %v236 = vmul.f32 %v233, %v235
    %v237 = vsub.f32 %v211, %v219
    %v238 = vmul.f32 %v237, %v236
    %v239 = vld [vmem:[%s5] sm:$0x1]
    %v241 = vlaneseq
    %v242 = vshrl.u32 %v241, 7
    %v243 = vsub.s32 0, %v242
    %v244 = vrot.slane %v239, %v243
    %v246 = vmul.f32 %v238, %v244
    %v247 = vld [vmem:[%s6] sm:$0x1]
    %v249 = vlaneseq
    %v250 = vshrl.u32 %v249, 7
    %v251 = vsub.s32 0, %v250
    %v252 = vrot.slane %v247, %v251
    %v254 = vadd.f32 %v246, %v252
    %255 = vst.msk [vmem:[#allocation2] sm:$0xff] %vm43, %v254
    // Predicated region
    $region30: #{tpu_custom_call.1} parent=1 // pred_check
      _
    $region31: #{tpu_custom_call.1} parent=1 // pred_check_branch
      %257 = sbr.rel (0) target = $region33
    $region32: #{tpu_custom_call.1} parent=1 // pred_region
      %s259 = ssub.s32 128, 128
      %260 = vsyncadd [#allocation3], %s259
      %s262 = sshll.u32 [#allocation2], 4
      %s263 = int_to_ptr.vmem [resolvable:$true] %s262
      %265 = dma.vmem_to_hbm [thread:$0]  %s263, 128, %s7, [#allocation3]
    $region33: #{tpu_custom_call.1} parent=1 // pred_fallthru
      _
    // Predicated region
    $region34: #{tpu_custom_call.1} parent=1 // pred_check
      _
    $region35: #{tpu_custom_call.1} parent=1 // pred_check_branch
      %267 = sbr.rel (0) target = $region37
    $region36: #{tpu_custom_call.1} parent=1 // pred_region
      %268 = dma.done [#allocation3], 128
    $region37: #{tpu_custom_call.1} parent=1 // pred_fallthru
      _
    %269 = vsyncpa [#allocation3], 1

</llo_original>
